<compile_context>
chip_gen: v7x
topology: tpu7x:2x2x1
jax: 0.10.0
libtpu: 0.0.40
codegen_flags: <defaults>
</compile_context>

<pallas_src>
import functools
import math

import jax
import jax.numpy as jnp
from jax.experimental import pallas as pl
from jax.experimental.pallas import tpu as pltpu

_INV_SQRT2 = 1.0 / math.sqrt(2.0)
_LANES = 128  # vreg lane width


def gelu_kernel(x_ref, o_ref):
    # Elementwise erf-GeLU: x * 0.5 * (1 + erf(x / sqrt(2))).
    # Upcast to f32 for the polynomial, store in the native I/O dtype.
    x = x_ref[...].astype(jnp.float32)
    y = x * 0.5 * (1.0 + jax.lax.erf(x * _INV_SQRT2))
    o_ref[...] = y.astype(o_ref.dtype)


def _round_up(a, b):
    return -(-a // b) * b


@functools.partial(jax.jit, static_argnames=("target_block_bytes",))
def gelu(x, *, target_block_bytes=1 << 20):
    """Elementwise erf-based GeLU of an arbitrarily shaped array via Pallas."""
    orig_shape = x.shape
    n = x.size
    if n == 0:
        return x

    dtype = x.dtype
    itemsize = jnp.dtype(dtype).itemsize
    # Min sublane tile: 8 for 32-bit, 16 for 16-bit, 32 for 8-bit dtypes.
    align = max(8, 32 // max(itemsize, 1))
    # TODO(synk): f64 inputs are computed in f32 inside the kernel (default
    # JAX x64 is off, so this path is normally unused).

    xf = jnp.ravel(x)

    # Pick a lane-dense slab width.  Fast path (no pad / no slice-back) when
    # n factors into (rows multiple of align) x (width multiple of 128).
    width = None
    for cand in (1024, 512, 256, 128):
        if n % (cand * align) == 0:
            width = cand
            break

    if width is not None:
        rows = n // width
        x2 = xf.reshape(rows, width)
        sliced = False
    else:
        # Slow path: zero-pad to an aligned slab (gelu(0) == 0, harmless),
        # slice the padding away afterwards.
        width = _LANES
        rows = _round_up(-(-n // width), align)
        x2 = jnp.pad(xf, (0, rows * width - n)).reshape(rows, width)
        sliced = True

    # ~1 MiB blocks: at the HBM-roofline knee; 2 buffers x (in+out) ~ 4 MiB
    # VMEM, comfortably under scoped defaults on v5e (16 MiB) / v6e / v7x.
    block_rows = min(rows, max(align, target_block_bytes // (width * itemsize)))
    block_rows = max(align, (block_rows // align) * align)
    # Keep >= 2 grid steps when the slab is big enough so both v7x
    # TensorCores are fed (no-op on single-TC v5e/v6e).
    if block_rows >= rows and rows >= 2 * align:
        block_rows = _round_up(-(-rows // 2), align)

    grid = (pl.cdiv(rows, block_rows),)

    out2 = pl.pallas_call(
        gelu_kernel,
        out_shape=jax.ShapeDtypeStruct((rows, width), dtype),
        grid_spec=pltpu.PrefetchScalarGridSpec(
            num_scalar_prefetch=0,
            grid=grid,
            in_specs=[pl.BlockSpec((block_rows, width), lambda i: (i, 0))],
            out_specs=pl.BlockSpec((block_rows, width), lambda i: (i, 0)),
        ),
        compiler_params=pltpu.CompilerParams(
            dimension_semantics=("parallel",)),
        input_output_aliases={0: 0},
        cost_estimate=pl.CostEstimate(
            flops=8 * rows * width,
            transcendentals=rows * width,
            bytes_accessed=2 * rows * width * itemsize),
    )(x2)

    if sliced:
        return out2.reshape(-1)[:n].reshape(orig_shape)
    return out2.reshape(orig_shape)


def _gelu_ref(x):
    # Pure-JAX reference matching the PyTorch module (erf-based GeLU).
    xf = x.astype(jnp.float32)
    return (xf * 0.5 * (1.0 + jax.lax.erf(xf * _INV_SQRT2))).astype(x.dtype)


if __name__ == "__main__":
    key = jax.random.PRNGKey(0)
    k1, k2, k3 = jax.random.split(key, 3)

    # BERT-ish FFN activation, f32 (fast path, single block): batch=2, seq=8,
    # hidden(ff)=64 -> 1024 elements.
    x32 = jax.random.normal(k1, (2, 8, 64), jnp.float32)
    o32 = jax.block_until_ready(gelu(x32))
    assert o32.shape == x32.shape and o32.dtype == x32.dtype
    assert bool(jnp.all(jnp.isfinite(o32)))
    assert bool(jnp.max(jnp.abs(o32 - _gelu_ref(x32))) < 1e-6)

    # bf16 activation: native-dtype streaming through the kernel.
    xbf = jax.random.normal(k2, (2, 8, 128), jnp.bfloat16)
    obf = jax.block_until_ready(gelu(xbf))
    assert obf.shape == xbf.shape and obf.dtype == jnp.bfloat16
    dbf = jnp.max(jnp.abs(obf.astype(jnp.float32) -
                          _gelu_ref(xbf).astype(jnp.float32)))
    assert bool(dbf < 3e-2)

    # Odd size exercising the padded slow path.
    xo = jax.random.normal(k3, (3, 5, 7), jnp.float32)
    oo = jax.block_until_ready(gelu(xo))
    assert oo.shape == xo.shape
    assert bool(jnp.max(jnp.abs(oo - _gelu_ref(xo))) < 1e-6)

    print("KERNEL_OK")
</pallas_src>

<mosaic_0001>
module attributes {stable_mosaic.version = 11 : i64} {
  func.func @gelu_kernel(%arg0: i32, %arg1: memref<8x128xf32, #tpu.memory_space<vmem>>, %arg2: memref<8x128xf32, #tpu.memory_space<vmem>>) attributes {dimension_semantics = [#tpu.dimension_semantics<parallel>], iteration_bounds = array<i64: 1>, scalar_prefetch = 0 : i64, scratch_operands = 0 : i64, tpu.core_type = #tpu.core_type<tc>, window_params = [{transform_indices = @transform_0, window_bounds = array<i64: 8, 128>}, {transform_indices = @transform_1, window_bounds = array<i64: 8, 128>}]} {
    %c0 = arith.constant 0 : index
    %c0_0 = arith.constant 0 : index
    %0 = vector.load %arg1[%c0, %c0_0] : memref<8x128xf32, #tpu.memory_space<vmem>>, vector<8x128xf32>
    %cst = arith.constant 5.000000e-01 : f32
    %1 = vector.broadcast %cst : f32 to vector<8x128xf32>
    %2 = arith.mulf %0, %1 : vector<8x128xf32>
    %cst_1 = arith.constant 0.707106769 : f32
    %3 = vector.broadcast %cst_1 : f32 to vector<8x128xf32>
    %4 = arith.mulf %0, %3 : vector<8x128xf32>
    %5 = math.erf %4 : vector<8x128xf32>
    %cst_2 = arith.constant 1.000000e+00 : f32
    %6 = vector.broadcast %cst_2 : f32 to vector<8x128xf32>
    %7 = arith.addf %6, %5 : vector<8x128xf32>
    %8 = arith.mulf %2, %7 : vector<8x128xf32>
    %c0_3 = arith.constant 0 : index
    %c0_4 = arith.constant 0 : index
    %9 = vector.load %arg2[%c0_3, %c0_4] : memref<8x128xf32, #tpu.memory_space<vmem>>, vector<8x128xf32>
    tpu.vector_store %arg2[%c0_3, %c0_4], %8 {strides = array<i32>} : memref<8x128xf32, #tpu.memory_space<vmem>>, vector<8x128xf32>,
    return
  }
  func.func @transform_0(%arg0: i32) -> (i32, i32) {
    %c0_i32 = arith.constant 0 : i32
    %c0_i32_0 = arith.constant 0 : i32
    return %arg0, %c0_i32 : i32, i32
  }
  func.func @transform_1(%arg0: i32) -> (i32, i32) {
    %c0_i32 = arith.constant 0 : i32
    %c0_i32_0 = arith.constant 0 : i32
    return %arg0, %c0_i32 : i32, i32
  }
}

</mosaic_0001>

<llo_original>
// kernel: gelu.1
$region0: #{gelu.1}
  #allocation0 [shape = 'u32[]', space=smem, size = 0x4, offset = 0x4, fixed_abs, tag = 'smem constant byte address 0x4 - core index']
  #allocation1 [shape = 'u32[144,128]{1,0:T(1,128)}', space=vmem, size = 0x12000, scoped, tag = 'internal scratch']
  %s0 = inlined_call_operand.vmem [shape: f32[8,128], index: 0, kind: input, shape index: {}, may-alias: {0,1}]
  %s1 = inlined_call_operand.vmem [shape: f32[8,128], index: 1, kind: output, shape index: {}, may-alias: {0,1}]
  %s2 = sld [smem:[#allocation0]]
  $region14: #{gelu.1} parent=0
    _
  %s4 = ssub.s32 1, %s2
  %s5 = scalar_select 0, %s4, %s2
  // Predicated region
  $region2: #{gelu.1} parent=0 // pred_check
    _
  $region3: #{gelu.1} parent=0 // pred_check_branch
    %7 = sbr.rel (0) target = $region5
  $region4: #{gelu.1} parent=0 // pred_region
    _
  $region5: #{gelu.1} parent=0 // pred_fallthru
    _
  %v8 = vld [vmem:[%s0] sm:$0xff]
  %v9 = vmul.f32 %v8, 0.5
  %v10 = vmul.f32 %v8, 0.70710677
  %v11 = verf.f32.pop %v10
  %v12 = vadd.f32 %v11, 1.0
  %v13 = vmul.f32 %v9, %v12
  %14 = vst [vmem:[%s1] sm:$0xff] %v13
  // Predicated region
  $region6: #{gelu.1} parent=0 // pred_check
    _
  $region7: #{gelu.1} parent=0 // pred_check_branch
    %16 = sbr.rel (0) target = $region9
  $region8: #{gelu.1} parent=0 // pred_region
    _
  $region9: #{gelu.1} parent=0 // pred_fallthru
    _
  // Predicated region
  $region10: #{gelu.1} parent=0 // pred_check
    _
  $region11: #{gelu.1} parent=0 // pred_check_branch
    %18 = sbr.rel (0) target = $region13
  $region12: #{gelu.1} parent=0 // pred_region
    _
  $region13: #{gelu.1} parent=0 // pred_fallthru
    _

</llo_original>
